<compile_context>
chip_gen: v6e
topology: v6e:2x2x1
jax: 0.10.0
libtpu: 0.0.40
codegen_flags: <defaults>
</compile_context>

<pallas_src>
import math
import jax
import jax.numpy as jnp
from jax.experimental import pallas as pl
from jax.experimental.pallas import tpu as pltpu


def modelh_kernel(x_ref, w1_ref, b1_ref, w2_ref, b2_ref, wo_ref, bo_ref, mu_ref):
    """One batch tile of the MLP. All weights/biases are VMEM-resident across the grid."""
    neg_slope = 0.01

    # hidden layer 1: linear + leaky_relu
    h = jnp.dot(x_ref[...], w1_ref[...], preferred_element_type=jnp.float32)
    h = h + b1_ref[...]
    h = jnp.maximum(h, neg_slope * h)

    # hidden layer 2: linear + leaky_relu
    h = jnp.dot(h, w2_ref[...], preferred_element_type=jnp.float32)
    h = h + b2_ref[...]
    h = jnp.maximum(h, neg_slope * h)

    # output head (mean of the Normal)
    m = jnp.dot(h, wo_ref[...], preferred_element_type=jnp.float32)
    mu_ref[...] = m + bo_ref[...]


def modelh_forward(x, params, *, block_rows=2048):
    """Runs the Pallas kernel. Returns (mu, scale) where scale is a scalar 1.0
    (Normal(mu, 1.0)); no full-size constant array is materialized."""
    w1, b1, w2, b2, wo, bo = params
    batch, state_dim = x.shape
    obs_dim = wo.shape[1]

    # Batch tile: either the full batch (small inputs) or a multiple-of-8 tile so the
    # sublane (8, 128) constraint is met and x/mu DMAs pipeline across grid steps.
    if batch <= block_rows:
        tb = batch                       # full-extent block: always legal
    else:
        tb = block_rows                  # multiple of 8 by construction
    grid = (pl.cdiv(batch, tb),)

    # Weights / biases: full-array blocks with a constant index_map -> resident in VMEM.
    def resident(arr):
        nd = arr.ndim
        return pl.BlockSpec(arr.shape, lambda i, _nd=nd: (0,) * _nd)

    mu = pl.pallas_call(
        modelh_kernel,
        out_shape=jax.ShapeDtypeStruct((batch, obs_dim), jnp.float32),
        grid=grid,
        in_specs=[
            pl.BlockSpec((tb, state_dim), lambda i: (i, 0)),   # x: blocked over batch
            resident(w1), resident(b1),
            resident(w2), resident(b2),
            resident(wo), resident(bo),
        ],
        out_specs=pl.BlockSpec((tb, obs_dim), lambda i: (i, 0)),
        compiler_params=pltpu.CompilerParams(
            dimension_semantics=("parallel",),                 # shard batch across TCs
        ),
    )(x, w1, b1, w2, b2, wo, bo)

    scale = jnp.float32(1.0)  # Normal(mu, 1.0): scalar, not a materialized array
    return mu, scale


def init_params(key, state_dim, h_dim, obs_dim):
    """Deterministic init mirroring the PyTorch module:
       - hidden weights: kaiming_normal_(nonlinearity='leaky_relu') (a=0 -> gain sqrt(2))
       - output weight : xavier_normal_
       - biases        : PyTorch nn.Linear default uniform(-1/sqrt(fan_in), +)
       Weights returned pre-transposed to (in_dim, out_dim); biases as (1, out_dim)."""
    params = []
    dims = [state_dim] + list(h_dim)
    keys = jax.random.split(key, 2 * (len(h_dim) + 1))
    ki = 0

    # hidden layers
    for in_d, out_d in zip(dims[:-1], dims[1:]):
        gain = math.sqrt(2.0)                           # kaiming leaky_relu default (a=0)
        std = gain / math.sqrt(in_d)                    # fan_in mode
        w = std * jax.random.normal(keys[ki], (out_d, in_d), jnp.float32)
        ki += 1
        bound = 1.0 / math.sqrt(in_d)
        b = jax.random.uniform(keys[ki], (1, out_d), jnp.float32, -bound, bound)
        ki += 1
        params.extend([w.T, b])

    # output layer (xavier normal)
    in_d, out_d = dims[-1], obs_dim
    std = math.sqrt(2.0 / (in_d + out_d))
    wo = std * jax.random.normal(keys[ki], (out_d, in_d), jnp.float32)
    ki += 1
    bound = 1.0 / math.sqrt(in_d)
    bo = jax.random.uniform(keys[ki], (1, out_d), jnp.float32, -bound, bound)
    params.extend([wo.T, bo])

    return tuple(params)


def reference_forward(x, params):
    """Pure-JAX reference for a correctness check."""
    w1, b1, w2, b2, wo, bo = params
    h = x @ w1 + b1
    h = jnp.where(h >= 0.0, h, 0.01 * h)
    h = h @ w2 + b2
    h = jnp.where(h >= 0.0, h, 0.01 * h)
    return h @ wo + bo


if __name__ == "__main__":
    # Small shapes consistent with the module: state_dim -> [16,16] -> obs_dim
    batch, state_dim, obs_dim = 8, 32, 8
    h_dim = [16, 16]

    key = jax.random.PRNGKey(0)
    pkey, xkey = jax.random.split(key)
    params = init_params(pkey, state_dim, h_dim, obs_dim)
    x = jax.random.normal(xkey, (batch, state_dim), jnp.float32)

    mu, scale = modelh_forward(x, params)
    mu = jax.block_until_ready(mu)

    mu_ref = reference_forward(x, params)
    assert mu.shape == (batch, obs_dim)
    assert jnp.allclose(mu, mu_ref, atol=1e-5, rtol=1e-5)
    assert float(scale) == 1.0

    # Also exercise the multi-step grid path (batch > block tile) once, cheaply.
    xb = jax.random.normal(xkey, (4096, state_dim), jnp.float32)
    mu_b, _ = modelh_forward(xb, params, block_rows=2048)
    mu_b = jax.block_until_ready(mu_b)
    assert jnp.allclose(mu_b, reference_forward(xb, params), atol=1e-4, rtol=1e-4)

    print("KERNEL_OK")
</pallas_src>

<mosaic_0001>
module attributes {stable_mosaic.version = 11 : i64} {
  func.func @modelh_kernel(%arg0: i32, %arg1: memref<8x32xf32, #tpu.memory_space<vmem>>, %arg2: memref<32x16xf32, #tpu.memory_space<vmem>>, %arg3: memref<1x16xf32, #tpu.memory_space<vmem>>, %arg4: memref<16x16xf32, #tpu.memory_space<vmem>>, %arg5: memref<1x16xf32, #tpu.memory_space<vmem>>, %arg6: memref<16x8xf32, #tpu.memory_space<vmem>>, %arg7: memref<1x8xf32, #tpu.memory_space<vmem>>, %arg8: memref<8x8xf32, #tpu.memory_space<vmem>>) attributes {dimension_semantics = [#tpu.dimension_semantics<parallel>], iteration_bounds = array<i64: 1>, scalar_prefetch = 0 : i64, scratch_operands = 0 : i64, tpu.core_type = #tpu.core_type<tc>, window_params = [{transform_indices = @transform_0, window_bounds = array<i64: 8, 32>}, {pipeline_mode = #tpu.pipeline_mode<synchronous>, transform_indices = @transform_1, window_bounds = array<i64: 32, 16>}, {pipeline_mode = #tpu.pipeline_mode<synchronous>, transform_indices = @transform_2, window_bounds = array<i64: 1, 16>}, {pipeline_mode = #tpu.pipeline_mode<synchronous>, transform_indices = @transform_3, window_bounds = array<i64: 16, 16>}, {pipeline_mode = #tpu.pipeline_mode<synchronous>, transform_indices = @transform_4, window_bounds = array<i64: 1, 16>}, {pipeline_mode = #tpu.pipeline_mode<synchronous>, transform_indices = @transform_5, window_bounds = array<i64: 16, 8>}, {pipeline_mode = #tpu.pipeline_mode<synchronous>, transform_indices = @transform_6, window_bounds = array<i64: 1, 8>}, {transform_indices = @transform_7, window_bounds = array<i64: 8, 8>}]} {
    %c0 = arith.constant 0 : index
    %c0_0 = arith.constant 0 : index
    %0 = vector.load %arg1[%c0, %c0_0] : memref<8x32xf32, #tpu.memory_space<vmem>>, vector<8x32xf32>
    %c0_1 = arith.constant 0 : index
    %c0_2 = arith.constant 0 : index
    %1 = vector.load %arg2[%c0_1, %c0_2] : memref<32x16xf32, #tpu.memory_space<vmem>>, vector<32x16xf32>
    %cst = arith.constant dense<0.000000e+00> : vector<8x16xf32>
    %2 = tpu.matmul %0, %1, %cst {dimension_numbers = #tpu.dot_dimension_numbers<[1], [0], [0], [1], [0, 0, 1, 1], [], []>} : vector<8x32xf32>, vector<32x16xf32>, vector<8x16xf32> -> vector<8x16xf32>
    %c0_3 = arith.constant 0 : index
    %c0_4 = arith.constant 0 : index
    %3 = vector.load %arg3[%c0_3, %c0_4] : memref<1x16xf32, #tpu.memory_space<vmem>>, vector<1x16xf32>
    %4 = vector.broadcast %3 : vector<1x16xf32> to vector<8x16xf32>
    %5 = arith.addf %2, %4 : vector<8x16xf32>
    %cst_5 = arith.constant 0.00999999977 : f32
    %6 = vector.broadcast %cst_5 : f32 to vector<8x16xf32>
    %7 = arith.mulf %6, %5 : vector<8x16xf32>
    %8 = arith.maximumf %5, %7 : vector<8x16xf32>
    %c0_6 = arith.constant 0 : index
    %c0_7 = arith.constant 0 : index
    %9 = vector.load %arg4[%c0_6, %c0_7] : memref<16x16xf32, #tpu.memory_space<vmem>>, vector<16x16xf32>
    %cst_8 = arith.constant dense<0.000000e+00> : vector<8x16xf32>
    %10 = tpu.matmul %8, %9, %cst_8 {dimension_numbers = #tpu.dot_dimension_numbers<[1], [0], [0], [1], [0, 0, 1, 1], [], []>} : vector<8x16xf32>, vector<16x16xf32>, vector<8x16xf32> -> vector<8x16xf32>
    %c0_9 = arith.constant 0 : index
    %c0_10 = arith.constant 0 : index
    %11 = vector.load %arg5[%c0_9, %c0_10] : memref<1x16xf32, #tpu.memory_space<vmem>>, vector<1x16xf32>
    %12 = vector.broadcast %11 : vector<1x16xf32> to vector<8x16xf32>
    %13 = arith.addf %10, %12 : vector<8x16xf32>
    %cst_11 = arith.constant 0.00999999977 : f32
    %14 = vector.broadcast %cst_11 : f32 to vector<8x16xf32>
    %15 = arith.mulf %14, %13 : vector<8x16xf32>
    %16 = arith.maximumf %13, %15 : vector<8x16xf32>
    %c0_12 = arith.constant 0 : index
    %c0_13 = arith.constant 0 : index
    %17 = vector.load %arg6[%c0_12, %c0_13] : memref<16x8xf32, #tpu.memory_space<vmem>>, vector<16x8xf32>
    %cst_14 = arith.constant dense<0.000000e+00> : vector<8x8xf32>
    %18 = tpu.matmul %16, %17, %cst_14 {dimension_numbers = #tpu.dot_dimension_numbers<[1], [0], [0], [1], [0, 0, 1, 1], [], []>} : vector<8x16xf32>, vector<16x8xf32>, vector<8x8xf32> -> vector<8x8xf32>
    %c0_15 = arith.constant 0 : index
    %c0_16 = arith.constant 0 : index
    %19 = vector.load %arg7[%c0_15, %c0_16] : memref<1x8xf32, #tpu.memory_space<vmem>>, vector<1x8xf32>
    %20 = vector.broadcast %19 : vector<1x8xf32> to vector<8x8xf32>
    %21 = arith.addf %18, %20 : vector<8x8xf32>
    %c0_17 = arith.constant 0 : index
    %c0_18 = arith.constant 0 : index
    %22 = vector.load %arg8[%c0_17, %c0_18] : memref<8x8xf32, #tpu.memory_space<vmem>>, vector<8x8xf32>
    tpu.vector_store %arg8[%c0_17, %c0_18], %21 {strides = array<i32>} : memref<8x8xf32, #tpu.memory_space<vmem>>, vector<8x8xf32>,
    return
  }
  func.func @transform_0(%arg0: i32) -> (i32, i32) {
    %c0_i32 = arith.constant 0 : i32
    %c0_i32_0 = arith.constant 0 : i32
    return %arg0, %c0_i32 : i32, i32
  }
  func.func @transform_1(%arg0: i32) -> (i32, i32) {
    %c0_i32 = arith.constant 0 : i32
    %c0_i32_0 = arith.constant 0 : i32
    %c0_i32_1 = arith.constant 0 : i32
    return %c0_i32, %c0_i32_0 : i32, i32
  }
  func.func @transform_2(%arg0: i32) -> (i32, i32) {
    %c0_i32 = arith.constant 0 : i32
    %c0_i32_0 = arith.constant 0 : i32
    %c0_i32_1 = arith.constant 0 : i32
    return %c0_i32, %c0_i32_0 : i32, i32
  }
  func.func @transform_3(%arg0: i32) -> (i32, i32) {
    %c0_i32 = arith.constant 0 : i32
    %c0_i32_0 = arith.constant 0 : i32
    %c0_i32_1 = arith.constant 0 : i32
    return %c0_i32, %c0_i32_0 : i32, i32
  }
  func.func @transform_4(%arg0: i32) -> (i32, i32) {
    %c0_i32 = arith.constant 0 : i32
    %c0_i32_0 = arith.constant 0 : i32
    %c0_i32_1 = arith.constant 0 : i32
    return %c0_i32, %c0_i32_0 : i32, i32
  }
  func.func @transform_5(%arg0: i32) -> (i32, i32) {
    %c0_i32 = arith.constant 0 : i32
    %c0_i32_0 = arith.constant 0 : i32
    %c0_i32_1 = arith.constant 0 : i32
    return %c0_i32, %c0_i32_0 : i32, i32
  }
  func.func @transform_6(%arg0: i32) -> (i32, i32) {
    %c0_i32 = arith.constant 0 : i32
    %c0_i32_0 = arith.constant 0 : i32
    %c0_i32_1 = arith.constant 0 : i32
    return %c0_i32, %c0_i32_0 : i32, i32
  }
  func.func @transform_7(%arg0: i32) -> (i32, i32) {
    %c0_i32 = arith.constant 0 : i32
    %c0_i32_0 = arith.constant 0 : i32
    return %arg0, %c0_i32 : i32, i32
  }
}

</mosaic_0001>

<llo_original>
// kernel: tpu_custom_call.1
$region0: #{tpu_custom_call.1}
  #allocation0 [shape = 'u32[]', space=smem, size = 0x4, offset = 0x4, fixed_abs, tag = 'smem constant byte address 0x4 - core index']
  #allocation1 [shape = 'u32[144,128]{1,0:T(1,128)}', space=vmem, size = 0x12000, scoped, tag = 'internal scratch']
  %s0 = inlined_call_operand.vmem [shape: f32[8,32], index: 0, kind: input, shape index: {}]
  %s1 = inlined_call_operand.vmem [shape: f32[32,16], index: 1, kind: input, shape index: {}]
  %s2 = inlined_call_operand.vmem [shape: f32[1,16], index: 2, kind: input, shape index: {}]
  %s3 = inlined_call_operand.vmem [shape: f32[16,16], index: 3, kind: input, shape index: {}]
  %s4 = inlined_call_operand.vmem [shape: f32[1,16], index: 4, kind: input, shape index: {}]
  %s5 = inlined_call_operand.vmem [shape: f32[16,8], index: 5, kind: input, shape index: {}]
  %s6 = inlined_call_operand.vmem [shape: f32[1,8], index: 6, kind: input, shape index: {}]
  %s7 = inlined_call_operand.hbm [shape: f32[8,8], index: 7, kind: output, shape index: {}]
  %s8 = sld [smem:[#allocation0]]
  $region38: #{tpu_custom_call.1} parent=0
    _
  %s10 = ssub.s32 1, %s8
  %s11 = scalar_select 0, %s10, %s8
  $region1: #{tpu_custom_call.1} parent=0
    #allocation2 [shape = 'u8[4096]{0}', space=vmem, size = 0x1000, scoped, tag = 'output window, operand 0, single buffered']
    #allocation3 [shape = 's32[1]{0}', space=sflag, size = 0x4, scoped, tag = 'scoped memory for tpu_custom_call.1']
    %12 = vsyncpa [#allocation3], 0
    // Predicated region
    $region2: #{tpu_custom_call.1} parent=1 // pred_check
      _
    $region3: #{tpu_custom_call.1} parent=1 // pred_check_branch
      %14 = sbr.rel (0) target = $region5
    $region4: #{tpu_custom_call.1} parent=1 // pred_region
      _
    $region5: #{tpu_custom_call.1} parent=1 // pred_fallthru
      _
    // Predicated region
    $region6: #{tpu_custom_call.1} parent=1 // pred_check
      _
    $region7: #{tpu_custom_call.1} parent=1 // pred_check_branch
      %16 = sbr.rel (0) target = $region9
    $region8: #{tpu_custom_call.1} parent=1 // pred_region
      _
    $region9: #{tpu_custom_call.1} parent=1 // pred_fallthru
      _
    // Predicated region
    $region10: #{tpu_custom_call.1} parent=1 // pred_check
      _
    $region11: #{tpu_custom_call.1} parent=1 // pred_check_branch
      %18 = sbr.rel (0) target = $region13
    $region12: #{tpu_custom_call.1} parent=1 // pred_region
      _
    $region13: #{tpu_custom_call.1} parent=1 // pred_fallthru
      _
    // Predicated region
    $region14: #{tpu_custom_call.1} parent=1 // pred_check
      _
    $region15: #{tpu_custom_call.1} parent=1 // pred_check_branch
      %20 = sbr.rel (0) target = $region17
    $region16: #{tpu_custom_call.1} parent=1 // pred_region
      _
    $region17: #{tpu_custom_call.1} parent=1 // pred_fallthru
      _
    // Predicated region
    $region18: #{tpu_custom_call.1} parent=1 // pred_check
      _
    $region19: #{tpu_custom_call.1} parent=1 // pred_check_branch
      %22 = sbr.rel (0) target = $region21
    $region20: #{tpu_custom_call.1} parent=1 // pred_region
      _
    $region21: #{tpu_custom_call.1} parent=1 // pred_fallthru
      _
    // Predicated region
    $region22: #{tpu_custom_call.1} parent=1 // pred_check
      _
    $region23: #{tpu_custom_call.1} parent=1 // pred_check_branch
      %24 = sbr.rel (0) target = $region25
    $region24: #{tpu_custom_call.1} parent=1 // pred_region
      _
    $region25: #{tpu_custom_call.1} parent=1 // pred_fallthru
      _
    // Predicated region
    $region26: #{tpu_custom_call.1} parent=1 // pred_check
      _
    $region27: #{tpu_custom_call.1} parent=1 // pred_check_branch
      %26 = sbr.rel (0) target = $region29
    $region28: #{tpu_custom_call.1} parent=1 // pred_region
      _
    $region29: #{tpu_custom_call.1} parent=1 // pred_fallthru
      _
    %v27 = vld [vmem:[%s0] sm:$0xff]
    %v28 = vld [vmem:[%s1] sm:$0xff]
    %v29 = vld [vmem:[%s1 + $0x8] sm:$0xff]
    %v30 = vld [vmem:[%s1 + $0x10] sm:$0xff]
    %v31 = vld [vmem:[%s1 + $0x18] sm:$0xff]
    %v32 = vld [vmem:[%s2] sm:$0x1]
    %v34 = vlaneseq
    %v35 = vshrl.u32 %v34, 7
    %v36 = vsub.s32 0, %v35
    %v37 = vrot.slane %v32, %v36
    %vm39 = vcmask 261120
    %v41 = vsel %vm39, %v27, 0
    %43 = vmatprep.subr.mxu0 0.0
    %44 = vmatpush1.msra.mxu0 0.0
    %45 = vmatprep.subr.mxu0 0.0
    %46 = vmatpush1.msra.mxu0 0.0
    %47 = vmatprep.subr.mxu0 0.0
    %48 = vmatpush1.msra.mxu0 0.0
    %49 = vmatprep.subr.mxu0 0.0
    %50 = vmatpush1.msra.mxu0 0.0
    %51 = vmatprep.subr.mxu0 0.0
    %52 = vmatpush1.msra.mxu0 0.0
    %53 = vmatprep.subr.mxu0 0.0
    %54 = vmatpush1.msra.mxu0 0.0
    %55 = vmatprep.subr.mxu0 0.0
    %56 = vmatpush1.msra.mxu0 0.0
    %57 = vmatprep.subr.mxu0 0.0
    %58 = vmatpush1.msra.mxu0 0.0
    %59 = vmatprep.subr.mxu0 0.0
    %60 = vmatpush1.msra.mxu0 0.0
    %61 = vmatprep.subr.mxu0 0.0
    %62 = vmatpush1.msra.mxu0 0.0
    %63 = vmatprep.subr.mxu0 0.0
    %64 = vmatpush1.msra.mxu0 0.0
    %65 = vmatprep.subr.mxu0 0.0
    %66 = vmatpush1.msra.mxu0 0.0
    %67 = vmatprep.subr.mxu0 0.0
    %68 = vmatpush1.msra.mxu0 %v31
    %69 = vmatprep.subr.mxu0 0.0
    %70 = vmatpush1.msra.mxu0 %v30
    %71 = vmatprep.subr.mxu0 0.0
    %72 = vmatpush1.msra.mxu0 %v29
    %73 = vmatprep.subr.mxu0 0.0
    %74 = vmatpush1.msra.mxu0 %v28
    %75 = vmatprep.subr.mxu0 0.0
    %76 = vmatpush2.msra.mxu0 0.0
    %77 = vmatprep.subr.mxu0 0.0
    %78 = vmatpush2.msra.mxu0 0.0
    %79 = vmatprep.subr.mxu0 0.0
    %80 = vmatpush2.msra.mxu0 0.0
    %81 = vmatprep.subr.mxu0 0.0
    %82 = vmatpush2.msra.mxu0 0.0
    %83 = vmatprep.subr.mxu0 0.0
    %84 = vmatpush2.msra.mxu0 0.0
    %85 = vmatprep.subr.mxu0 0.0
    %86 = vmatpush2.msra.mxu0 0.0
    %87 = vmatprep.subr.mxu0 0.0
    %88 = vmatpush2.msra.mxu0 0.0
    %89 = vmatprep.subr.mxu0 0.0
    %90 = vmatpush2.msra.mxu0 0.0
    %91 = vmatprep.subr.mxu0 0.0
    %92 = vmatpush2.msra.mxu0 0.0
    %93 = vmatprep.subr.mxu0 0.0
    %94 = vmatpush2.msra.mxu0 0.0
    %95 = vmatprep.subr.mxu0 0.0
    %96 = vmatpush2.msra.mxu0 0.0
    %97 = vmatprep.subr.mxu0 0.0
    %98 = vmatpush2.msra.mxu0 0.0
    %99 = vmatprep.subr.mxu0 0.0
    %100 = vmatpush2.msra.mxu0 0.0
    %101 = vmatprep.subr.mxu0 0.0
    %102 = vmatpush2.msra.mxu0 0.0
    %103 = vmatprep.subr.mxu0 0.0
    %104 = vmatpush2.msra.mxu0 0.0
    %105 = vmatprep.subr.mxu0 0.0
    %106 = vmatpush2.msra.mxu0 0.0
    %107 = vmatprep.mubr.f32.mxu0 0.0
    %108 = vmatmul.mubr.f32.gmra.mxu0 %v41
    %v109 = vpop.f32.mrf.mxu0
    %v110 = vadd.f32 %v37, %v109
    %v111 = vpop.f32.mrf.mxu0
    %112 = vdwg.mxu0
    %v113 = vmul.f32 %v110, 0.01
    %v114 = vmax.f32 %v110, %v113
    %v115 = vld [vmem:[%s3] sm:$0xff]
    %v116 = vld [vmem:[%s3 + $0x8] sm:$0xff]
    %v117 = vld [vmem:[%s4] sm:$0x1]
    %v119 = vlaneseq
    %v120 = vshrl.u32 %v119, 7
    %v121 = vsub.s32 0, %v120
    %v122 = vrot.slane %v117, %v121
    %vm124 = vcmask 130048
    %v126 = vsel %vm124, %v114, 0
    %128 = vmatprep.subr.mxu0 0.0
    %129 = vmatpush1.msra.mxu0 0.0
    %130 = vmatprep.subr.mxu0 0.0
    %131 = vmatpush1.msra.mxu0 0.0
    %132 = vmatprep.subr.mxu0 0.0
    %133 = vmatpush1.msra.mxu0 0.0
    %134 = vmatprep.subr.mxu0 0.0
    %135 = vmatpush1.msra.mxu0 0.0
    %136 = vmatprep.subr.mxu0 0.0
    %137 = vmatpush1.msra.mxu0 0.0
    %138 = vmatprep.subr.mxu0 0.0
    %139 = vmatpush1.msra.mxu0 0.0
    %140 = vmatprep.subr.mxu0 0.0
    %141 = vmatpush1.msra.mxu0 0.0
    %142 = vmatprep.subr.mxu0 0.0
    %143 = vmatpush1.msra.mxu0 0.0
    %144 = vmatprep.subr.mxu0 0.0
    %145 = vmatpush1.msra.mxu0 0.0
    %146 = vmatprep.subr.mxu0 0.0
    %147 = vmatpush1.msra.mxu0 0.0
    %148 = vmatprep.subr.mxu0 0.0
    %149 = vmatpush1.msra.mxu0 0.0
    %150 = vmatprep.subr.mxu0 0.0
    %151 = vmatpush1.msra.mxu0 0.0
    %152 = vmatprep.subr.mxu0 0.0
    %153 = vmatpush1.msra.mxu0 0.0
    %154 = vmatprep.subr.mxu0 0.0
    %155 = vmatpush1.msra.mxu0 0.0
    %156 = vmatprep.subr.mxu0 0.0
    %157 = vmatpush1.msra.mxu0 %v116
    %158 = vmatprep.subr.mxu0 0.0
    %159 = vmatpush1.msra.mxu0 %v115
    %160 = vmatprep.subr.mxu0 0.0
    %161 = vmatpush2.msra.mxu0 0.0
    %162 = vmatprep.subr.mxu0 0.0
    %163 = vmatpush2.msra.mxu0 0.0
    %164 = vmatprep.subr.mxu0 0.0
    %165 = vmatpush2.msra.mxu0 0.0
    %166 = vmatprep.subr.mxu0 0.0
    %167 = vmatpush2.msra.mxu0 0.0
    %168 = vmatprep.subr.mxu0 0.0
    %169 = vmatpush2.msra.mxu0 0.0
    %170 = vmatprep.subr.mxu0 0.0
    %171 = vmatpush2.msra.mxu0 0.0
    %172 = vmatprep.subr.mxu0 0.0
    %173 = vmatpush2.msra.mxu0 0.0
    %174 = vmatprep.subr.mxu0 0.0
    %175 = vmatpush2.msra.mxu0 0.0
    %176 = vmatprep.subr.mxu0 0.0
    %177 = vmatpush2.msra.mxu0 0.0
    %178 = vmatprep.subr.mxu0 0.0
    %179 = vmatpush2.msra.mxu0 0.0
    %180 = vmatprep.subr.mxu0 0.0
    %181 = vmatpush2.msra.mxu0 0.0
    %182 = vmatprep.subr.mxu0 0.0
    %183 = vmatpush2.msra.mxu0 0.0
    %184 = vmatprep.subr.mxu0 0.0
    %185 = vmatpush2.msra.mxu0 0.0
    %186 = vmatprep.subr.mxu0 0.0
    %187 = vmatpush2.msra.mxu0 0.0
    %188 = vmatprep.subr.mxu0 0.0
    %189 = vmatpush2.msra.mxu0 0.0
    %190 = vmatprep.subr.mxu0 0.0
    %191 = vmatpush2.msra.mxu0 0.0
    %192 = vmatprep.mubr.f32.mxu0 0.0
    %193 = vmatmul.mubr.f32.gmra.mxu0 %v126
    %v194 = vpop.f32.mrf.mxu0
    %v195 = vadd.f32 %v122, %v194
    %v196 = vpop.f32.mrf.mxu0
    %197 = vdwg.mxu0
    %v198 = vmul.f32 %v195, 0.01
    %v199 = vmax.f32 %v195, %v198
    %v200 = vld [vmem:[%s5] sm:$0xff]
    %v201 = vld [vmem:[%s5 + $0x8] sm:$0xff]
    %v202 = vld [vmem:[%s6] sm:$0x1]
    %v204 = vlaneseq
    %v205 = vshrl.u32 %v204, 7
    %v206 = vsub.s32 0, %v205
    %v207 = vrot.slane %v202, %v206
    %v210 = vsel %vm124, %v199, 0
    %212 = vmatprep.subr.mxu0 0.0
    %213 = vmatpush1.msra.mxu0 0.0
    %214 = vmatprep.subr.mxu0 0.0
    %215 = vmatpush1.msra.mxu0 0.0
    %216 = vmatprep.subr.mxu0 0.0
    %217 = vmatpush1.msra.mxu0 0.0
    %218 = vmatprep.subr.mxu0 0.0
    %219 = vmatpush1.msra.mxu0 0.0
    %220 = vmatprep.subr.mxu0 0.0
    %221 = vmatpush1.msra.mxu0 0.0
    %222 = vmatprep.subr.mxu0 0.0
    %223 = vmatpush1.msra.mxu0 0.0
    %224 = vmatprep.subr.mxu0 0.0
    %225 = vmatpush1.msra.mxu0 0.0
    %226 = vmatprep.subr.mxu0 0.0
    %227 = vmatpush1.msra.mxu0 0.0
    %228 = vmatprep.subr.mxu0 0.0
    %229 = vmatpush1.msra.mxu0 0.0
    %230 = vmatprep.subr.mxu0 0.0
    %231 = vmatpush1.msra.mxu0 0.0
    %232 = vmatprep.subr.mxu0 0.0
    %233 = vmatpush1.msra.mxu0 0.0
    %234 = vmatprep.subr.mxu0 0.0
    %235 = vmatpush1.msra.mxu0 0.0
    %236 = vmatprep.subr.mxu0 0.0
    %237 = vmatpush1.msra.mxu0 0.0
    %238 = vmatprep.subr.mxu0 0.0
    %239 = vmatpush1.msra.mxu0 0.0
    %240 = vmatprep.subr.mxu0 0.0
    %241 = vmatpush1.msra.mxu0 %v201
    %242 = vmatprep.subr.mxu0 0.0
    %243 = vmatpush1.msra.mxu0 %v200
    %244 = vmatprep.subr.mxu0 0.0
    %245 = vmatpush2.msra.mxu0 0.0
    %246 = vmatprep.subr.mxu0 0.0
    %247 = vmatpush2.msra.mxu0 0.0
    %248 = vmatprep.subr.mxu0 0.0
    %249 = vmatpush2.msra.mxu0 0.0
    %250 = vmatprep.subr.mxu0 0.0
    %251 = vmatpush2.msra.mxu0 0.0
    %252 = vmatprep.subr.mxu0 0.0
    %253 = vmatpush2.msra.mxu0 0.0
    %254 = vmatprep.subr.mxu0 0.0
    %255 = vmatpush2.msra.mxu0 0.0
    %256 = vmatprep.subr.mxu0 0.0
    %257 = vmatpush2.msra.mxu0 0.0
    %258 = vmatprep.subr.mxu0 0.0
    %259 = vmatpush2.msra.mxu0 0.0
    %260 = vmatprep.subr.mxu0 0.0
    %261 = vmatpush2.msra.mxu0 0.0
    %262 = vmatprep.subr.mxu0 0.0
    %263 = vmatpush2.msra.mxu0 0.0
    %264 = vmatprep.subr.mxu0 0.0
    %265 = vmatpush2.msra.mxu0 0.0
    %266 = vmatprep.subr.mxu0 0.0
    %267 = vmatpush2.msra.mxu0 0.0
    %268 = vmatprep.subr.mxu0 0.0
    %269 = vmatpush2.msra.mxu0 0.0
    %270 = vmatprep.subr.mxu0 0.0
    %271 = vmatpush2.msra.mxu0 0.0
    %272 = vmatprep.subr.mxu0 0.0
    %273 = vmatpush2.msra.mxu0 0.0
    %274 = vmatprep.subr.mxu0 0.0
    %275 = vmatpush2.msra.mxu0 0.0
    %276 = vmatprep.mubr.f32.mxu0 0.0
    %277 = vmatmul.mubr.f32.gmra.mxu0 %v210
    %v278 = vpop.f32.mrf.mxu0
    %v279 = vadd.f32 %v207, %v278
    %v280 = vpop.f32.mrf.mxu0
    %281 = vdwg.mxu0
    %vm282 = vcmask 64512
    %283 = vst.msk [vmem:[#allocation2] sm:$0xff] %vm282, %v279
    // Predicated region
    $region30: #{tpu_custom_call.1} parent=1 // pred_check
      _
    $region31: #{tpu_custom_call.1} parent=1 // pred_check_branch
      %285 = sbr.rel (0) target = $region33
    $region32: #{tpu_custom_call.1} parent=1 // pred_region
      %s287 = ssub.s32 128, 128
      %288 = vsyncadd [#allocation3], %s287
      %s290 = sshll.u32 [#allocation2], 4
      %s291 = int_to_ptr.vmem [resolvable:$true] %s290
      %293 = dma.vmem_to_hbm [thread:$0]  %s291, 128, %s7, [#allocation3]
    $region33: #{tpu_custom_call.1} parent=1 // pred_fallthru
      _
    // Predicated region
    $region34: #{tpu_custom_call.1} parent=1 // pred_check
      _
    $region35: #{tpu_custom_call.1} parent=1 // pred_check_branch
      %295 = sbr.rel (0) target = $region37
    $region36: #{tpu_custom_call.1} parent=1 // pred_region
      %296 = dma.done [#allocation3], 128
    $region37: #{tpu_custom_call.1} parent=1 // pred_fallthru
      _
    %297 = vsyncpa [#allocation3], 1

</llo_original>
